<compile_context>
chip_gen: v7x
topology: tpu7x:2x2x1
jax: 0.10.0
libtpu: 0.0.40
codegen_flags: <defaults>
</compile_context>

<pallas_src>
import functools

import jax
import jax.numpy as jnp
from jax.experimental import pallas as pl
from jax.experimental.pallas import tpu as pltpu


def _spatial_transformer_kernel(h, w, grid_ref, src_ref, flow_ref, out_ref):
    # grid_ref : (2, TN)      identity grid tile (row coord, col coord)
    # src_ref  : (1, C*H, W)  source image for this batch element (resident across tiles)
    # flow_ref : (1, 2, TN)   displacement tile (ch0 = row/y, ch1 = col/x)
    # out_ref  : (1, C, TN)
    C = out_ref.shape[1]
    CH = src_ref.shape[1]
    TN = out_ref.shape[2]

    g = grid_ref[...].astype(jnp.float32)            # (2, TN)
    fl = flow_ref[0].astype(jnp.float32)             # (2, TN)
    gi, gj = g[0:1], g[1:2]
    fy, fx = fl[0:1], fl[1:2]

    # new_locs = grid + flow, normalized to [-1, 1] (align_corners=True) and then
    # un-normalized exactly as F.grid_sample does internally.
    ny = 2.0 * ((gi + fy) / (h - 1) - 0.5)
    nx = 2.0 * ((gj + fx) / (w - 1) - 0.5)
    y = (ny + 1.0) * 0.5 * (h - 1)
    x = (nx + 1.0) * 0.5 * (w - 1)

    y0f = jnp.floor(y)
    x0f = jnp.floor(x)
    y1f = y0f + 1.0
    x1f = x0f + 1.0
    wy1 = y - y0f
    wy0 = 1.0 - wy1
    wx1 = x - x0f
    wx0 = 1.0 - wx1

    def clip_and_mask(cf, wgt, size):
        # zero padding: out-of-range corners get zero weight; the index is clipped so
        # the one-hot still selects a valid (but zero-weighted) row/column.
        valid = (cf >= 0.0) & (cf <= size - 1.0)
        ci = jnp.clip(cf, 0.0, size - 1.0).astype(jnp.int32)
        return ci, wgt * valid.astype(jnp.float32)

    x0i, wx0e = clip_and_mask(x0f, wx0, w)
    x1i, wx1e = clip_and_mask(x1f, wx1, w)
    y0i, wy0e = clip_and_mask(y0f, wy0, h)
    y1i, wy1e = clip_and_mask(y1f, wy1, h)

    # --- column pass (MXU): gather + x-blend along W with ONE combined selection matrix
    wiota = jax.lax.broadcasted_iota(jnp.int32, (w, TN), 0)
    sx = ((wiota == x0i).astype(jnp.float32) * wx0e
          + (wiota == x1i).astype(jnp.float32) * wx1e)                  # (W, TN)
    src2d = src_ref[0].astype(jnp.float32)                              # (C*H, W)
    col = jnp.dot(src2d, sx, preferred_element_type=jnp.float32)        # (C*H, TN)

    # --- row pass (VPU blend + tiny segmented-sum matmul over H)
    hiota = jax.lax.broadcasted_iota(jnp.int32, (h, TN), 0)
    ry_h = ((hiota == y0i).astype(jnp.float32) * wy0e
            + (hiota == y1i).astype(jnp.float32) * wy1e)                # (H, TN)
    ry = jnp.tile(ry_h, (C, 1))                                         # (C*H, TN)
    blended = col * ry                                                  # (C*H, TN)

    # seg[c, r] = 1 iff row r belongs to channel c  (c*H <= r < (c+1)*H)
    ciota = jax.lax.broadcasted_iota(jnp.int32, (C, CH), 0)
    riota = jax.lax.broadcasted_iota(jnp.int32, (C, CH), 1)
    seg = ((riota >= ciota * h) & (riota < ciota * h + h)).astype(jnp.float32)  # (C, C*H)
    out = jnp.dot(seg, blended, preferred_element_type=jnp.float32)     # (C, TN)

    out_ref[0] = out.astype(out_ref.dtype)


def spatial_transformer(src, flow, mode="bilinear", tn=128):
    """src: (B, C, H, W), flow: (B, 2, H, W)  ->  (B, C, H, W)."""
    # TODO(synk): only mode='bilinear' and 2-D spatial inputs are implemented
    #             ('nearest' / 3-D volumes not supported).
    assert mode == "bilinear"
    assert tn % 128 == 0, "pixel tile must be lane-dense (multiple of 128)"
    B, C, H, W = src.shape
    assert flow.shape == (B, 2, H, W)
    # The PyTorch module itself divides by (size-1); size-1 spatial dims are undefined.
    assert H > 1 and W > 1

    HW = H * W
    n_tiles = pl.cdiv(HW, tn)
    HW_pad = n_tiles * tn

    # Identity grid buffer (same as the PyTorch registered buffer), flattened + padded.
    gi = jnp.broadcast_to(jnp.arange(H, dtype=jnp.float32)[:, None], (H, W))
    gj = jnp.broadcast_to(jnp.arange(W, dtype=jnp.float32)[None, :], (H, W))
    grid = jnp.stack([gi, gj], axis=0).reshape(2, HW)

    src2d = src.reshape(B, C * H, W)           # matmul LHS layout: rows = (c, h), cols = w
    flow_flat = flow.reshape(B, 2, HW)
    if HW_pad != HW:
        pad = HW_pad - HW
        grid = jnp.pad(grid, ((0, 0), (0, pad)))
        flow_flat = jnp.pad(flow_flat, ((0, 0), (0, 0), (0, pad)))

    kernel = functools.partial(_spatial_transformer_kernel, H, W)

    out_flat = pl.pallas_call(
        kernel,
        out_shape=jax.ShapeDtypeStruct((B, C, HW_pad), src.dtype),
        grid_spec=pltpu.PrefetchScalarGridSpec(
            num_scalar_prefetch=0,
            grid=(B, n_tiles),                                    # B outer, pixel tiles inner
            in_specs=[
                pl.BlockSpec((2, tn), lambda b, n: (0, n)),       # identity grid tile (shared)
                pl.BlockSpec((1, C * H, W), lambda b, n: (b, 0, 0)),  # src: resident across n
                pl.BlockSpec((1, 2, tn), lambda b, n: (b, 0, n)),     # flow tile
            ],
            out_specs=pl.BlockSpec((1, C, tn), lambda b, n: (b, 0, n)),
        ),
        compiler_params=pltpu.CompilerParams(
            dimension_semantics=("parallel", "parallel")),        # both shardable on v7x megacore
    )(grid, src2d, flow_flat)

    return out_flat[:, :, :HW].reshape(B, C, H, W)


def _reference(src, flow):
    """Pure-JAX emulation of the PyTorch forward (grid_sample bilinear, align_corners=True)."""
    B, C, H, W = src.shape
    gi = jnp.broadcast_to(jnp.arange(H, dtype=jnp.float32)[:, None], (H, W))
    gj = jnp.broadcast_to(jnp.arange(W, dtype=jnp.float32)[None, :], (H, W))
    y = gi[None] + flow[:, 0]
    x = gj[None] + flow[:, 1]
    ny = 2.0 * (y / (H - 1) - 0.5)
    nx = 2.0 * (x / (W - 1) - 0.5)
    yy = (ny + 1.0) * 0.5 * (H - 1)
    xx = (nx + 1.0) * 0.5 * (W - 1)
    y0 = jnp.floor(yy)
    x0 = jnp.floor(xx)
    out = jnp.zeros_like(src)
    for dy, dx in [(0, 0), (0, 1), (1, 0), (1, 1)]:
        yc = y0 + dy
        xc = x0 + dx
        wy = (yy - y0) if dy == 1 else (1.0 - (yy - y0))
        wx = (xx - x0) if dx == 1 else (1.0 - (xx - x0))
        valid = (yc >= 0) & (yc <= H - 1) & (xc >= 0) & (xc <= W - 1)
        wgt = wy * wx * valid.astype(jnp.float32)
        yi = jnp.clip(yc, 0, H - 1).astype(jnp.int32)
        xi = jnp.clip(xc, 0, W - 1).astype(jnp.int32)
        gathered = jax.vmap(lambda s, a, b: s[:, a, b])(src, yi, xi)  # (B, C, H, W)
        out = out + gathered * wgt[:, None]
    return out


if __name__ == "__main__":
    key = jax.random.PRNGKey(0)
    B, C, H, W = 2, 4, 16, 16
    k1, k2 = jax.random.split(key)
    src = jax.random.normal(k1, (B, C, H, W), dtype=jnp.float32)
    flow = jax.random.normal(k2, (B, 2, H, W), dtype=jnp.float32) * 3.0

    out = spatial_transformer(src, flow)
    jax.block_until_ready(out)

    ref = _reference(src, flow)
    assert out.shape == (B, C, H, W)
    if not jnp.allclose(out, ref, atol=1e-4, rtol=1e-4):
        raise AssertionError("Pallas output does not match reference")
    print("KERNEL_OK")
</pallas_src>

<mosaic_0001>
module attributes {stable_mosaic.version = 11 : i64} {
  func.func @_spatial_transformer_kernel(%arg0: i32, %arg1: i32, %arg2: memref<2x128xf32, #tpu.memory_space<vmem>>, %arg3: memref<1x64x16xf32, #tpu.memory_space<vmem>>, %arg4: memref<1x2x128xf32, #tpu.memory_space<vmem>>, %arg5: memref<1x4x128xf32, #tpu.memory_space<vmem>>) attributes {dimension_semantics = [#tpu.dimension_semantics<parallel>, #tpu.dimension_semantics<parallel>], iteration_bounds = array<i64: 2, 2>, scalar_prefetch = 0 : i64, scratch_operands = 0 : i64, tpu.core_type = #tpu.core_type<tc>, window_params = [{transform_indices = @transform_0, window_bounds = array<i64: 2, 128>}, {transform_indices = @transform_1, window_bounds = array<i64: 1, 64, 16>}, {transform_indices = @transform_2, window_bounds = array<i64: 1, 2, 128>}, {transform_indices = @transform_3, window_bounds = array<i64: 1, 4, 128>}]} {
    %c0 = arith.constant 0 : index
    %c0_0 = arith.constant 0 : index
    %0 = vector.load %arg2[%c0, %c0_0] : memref<2x128xf32, #tpu.memory_space<vmem>>, vector<2x128xf32>
    %c0_1 = arith.constant 0 : index
    %c0_2 = arith.constant 0 : index
    %c0_3 = arith.constant 0 : index
    %1 = vector.load %arg4[%c0_1, %c0_2, %c0_3] : memref<1x2x128xf32, #tpu.memory_space<vmem>>, vector<1x2x128xf32>
    %2 = vector.shape_cast %1 : vector<1x2x128xf32> to vector<2x128xf32>
    %3 = vector.extract_strided_slice %0 {offsets = [0, 0], sizes = [1, 128], strides = [1, 1]} : vector<2x128xf32> to vector<1x128xf32>
    %4 = vector.extract_strided_slice %0 {offsets = [1, 0], sizes = [1, 128], strides = [1, 1]} : vector<2x128xf32> to vector<1x128xf32>
    %5 = vector.extract_strided_slice %2 {offsets = [0, 0], sizes = [1, 128], strides = [1, 1]} : vector<2x128xf32> to vector<1x128xf32>
    %6 = vector.extract_strided_slice %2 {offsets = [1, 0], sizes = [1, 128], strides = [1, 1]} : vector<2x128xf32> to vector<1x128xf32>
    %7 = arith.addf %3, %5 : vector<1x128xf32>
    %cst = arith.constant 1.500000e+01 : f32
    %8 = vector.broadcast %cst : f32 to vector<1x128xf32>
    %9 = arith.divf %7, %8 : vector<1x128xf32>
    %cst_4 = arith.constant 5.000000e-01 : f32
    %10 = vector.broadcast %cst_4 : f32 to vector<1x128xf32>
    %11 = arith.subf %9, %10 : vector<1x128xf32>
    %cst_5 = arith.constant 2.000000e+00 : f32
    %12 = vector.broadcast %cst_5 : f32 to vector<1x128xf32>
    %13 = arith.mulf %12, %11 : vector<1x128xf32>
    %14 = arith.addf %4, %6 : vector<1x128xf32>
    %cst_6 = arith.constant 1.500000e+01 : f32
    %15 = vector.broadcast %cst_6 : f32 to vector<1x128xf32>
    %16 = arith.divf %14, %15 : vector<1x128xf32>
    %cst_7 = arith.constant 5.000000e-01 : f32
    %17 = vector.broadcast %cst_7 : f32 to vector<1x128xf32>
    %18 = arith.subf %16, %17 : vector<1x128xf32>
    %cst_8 = arith.constant 2.000000e+00 : f32
    %19 = vector.broadcast %cst_8 : f32 to vector<1x128xf32>
    %20 = arith.mulf %19, %18 : vector<1x128xf32>
    %cst_9 = arith.constant 1.000000e+00 : f32
    %21 = vector.broadcast %cst_9 : f32 to vector<1x128xf32>
    %22 = arith.addf %13, %21 : vector<1x128xf32>
    %cst_10 = arith.constant 5.000000e-01 : f32
    %23 = vector.broadcast %cst_10 : f32 to vector<1x128xf32>
    %24 = arith.mulf %22, %23 : vector<1x128xf32>
    %cst_11 = arith.constant 1.500000e+01 : f32
    %25 = vector.broadcast %cst_11 : f32 to vector<1x128xf32>
    %26 = arith.mulf %24, %25 : vector<1x128xf32>
    %cst_12 = arith.constant 1.000000e+00 : f32
    %27 = vector.broadcast %cst_12 : f32 to vector<1x128xf32>
    %28 = arith.addf %20, %27 : vector<1x128xf32>
    %cst_13 = arith.constant 5.000000e-01 : f32
    %29 = vector.broadcast %cst_13 : f32 to vector<1x128xf32>
    %30 = arith.mulf %28, %29 : vector<1x128xf32>
    %cst_14 = arith.constant 1.500000e+01 : f32
    %31 = vector.broadcast %cst_14 : f32 to vector<1x128xf32>
    %32 = arith.mulf %30, %31 : vector<1x128xf32>
    %33 = math.floor %26 : vector<1x128xf32>
    %34 = math.floor %32 : vector<1x128xf32>
    %cst_15 = arith.constant 1.000000e+00 : f32
    %35 = vector.broadcast %cst_15 : f32 to vector<1x128xf32>
    %36 = arith.addf %33, %35 : vector<1x128xf32>
    %cst_16 = arith.constant 1.000000e+00 : f32
    %37 = vector.broadcast %cst_16 : f32 to vector<1x128xf32>
    %38 = arith.addf %34, %37 : vector<1x128xf32>
    %39 = arith.subf %26, %33 : vector<1x128xf32>
    %cst_17 = arith.constant 1.000000e+00 : f32
    %40 = vector.broadcast %cst_17 : f32 to vector<1x128xf32>
    %41 = arith.subf %40, %39 : vector<1x128xf32>
    %42 = arith.subf %32, %34 : vector<1x128xf32>
    %cst_18 = arith.constant 1.000000e+00 : f32
    %43 = vector.broadcast %cst_18 : f32 to vector<1x128xf32>
    %44 = arith.subf %43, %42 : vector<1x128xf32>
    %cst_19 = arith.constant 0.000000e+00 : f32
    %45 = vector.broadcast %cst_19 : f32 to vector<1x128xf32>
    %46 = arith.cmpf oge, %34, %45 : vector<1x128xf32>
    %cst_20 = arith.constant 1.500000e+01 : f32
    %47 = vector.broadcast %cst_20 : f32 to vector<1x128xf32>
    %48 = arith.cmpf ole, %34, %47 : vector<1x128xf32>
    %49 = arith.andi %46, %48 : vector<1x128xi1>
    %cst_21 = arith.constant 0.000000e+00 : f32
    %cst_22 = arith.constant 1.500000e+01 : f32
    %50 = vector.broadcast %cst_21 : f32 to vector<1x128xf32>
    %51 = arith.maximumf %50, %34 : vector<1x128xf32>
    %52 = vector.broadcast %cst_22 : f32 to vector<1x128xf32>
    %53 = arith.minimumf %52, %51 : vector<1x128xf32>
    %54 = arith.fptosi %53 : vector<1x128xf32> to vector<1x128xi32>
    %55 = arith.extui %49 : vector<1x128xi1> to vector<1x128xi32>
    %56 = arith.sitofp %55 : vector<1x128xi32> to vector<1x128xf32>
    %57 = arith.mulf %44, %56 : vector<1x128xf32>
    %cst_23 = arith.constant 0.000000e+00 : f32
    %58 = vector.broadcast %cst_23 : f32 to vector<1x128xf32>
    %59 = arith.cmpf oge, %38, %58 : vector<1x128xf32>
    %cst_24 = arith.constant 1.500000e+01 : f32
    %60 = vector.broadcast %cst_24 : f32 to vector<1x128xf32>
    %61 = arith.cmpf ole, %38, %60 : vector<1x128xf32>
    %62 = arith.andi %59, %61 : vector<1x128xi1>
    %cst_25 = arith.constant 0.000000e+00 : f32
    %cst_26 = arith.constant 1.500000e+01 : f32
    %63 = vector.broadcast %cst_25 : f32 to vector<1x128xf32>
    %64 = arith.maximumf %63, %38 : vector<1x128xf32>
    %65 = vector.broadcast %cst_26 : f32 to vector<1x128xf32>
    %66 = arith.minimumf %65, %64 : vector<1x128xf32>
    %67 = arith.fptosi %66 : vector<1x128xf32> to vector<1x128xi32>
    %68 = arith.extui %62 : vector<1x128xi1> to vector<1x128xi32>
    %69 = arith.sitofp %68 : vector<1x128xi32> to vector<1x128xf32>
    %70 = arith.mulf %42, %69 : vector<1x128xf32>
    %cst_27 = arith.constant 0.000000e+00 : f32
    %71 = vector.broadcast %cst_27 : f32 to vector<1x128xf32>
    %72 = arith.cmpf oge, %33, %71 : vector<1x128xf32>
    %cst_28 = arith.constant 1.500000e+01 : f32
    %73 = vector.broadcast %cst_28 : f32 to vector<1x128xf32>
    %74 = arith.cmpf ole, %33, %73 : vector<1x128xf32>
    %75 = arith.andi %72, %74 : vector<1x128xi1>
    %cst_29 = arith.constant 0.000000e+00 : f32
    %cst_30 = arith.constant 1.500000e+01 : f32
    %76 = vector.broadcast %cst_29 : f32 to vector<1x128xf32>
    %77 = arith.maximumf %76, %33 : vector<1x128xf32>
    %78 = vector.broadcast %cst_30 : f32 to vector<1x128xf32>
    %79 = arith.minimumf %78, %77 : vector<1x128xf32>
    %80 = arith.fptosi %79 : vector<1x128xf32> to vector<1x128xi32>
    %81 = arith.extui %75 : vector<1x128xi1> to vector<1x128xi32>
    %82 = arith.sitofp %81 : vector<1x128xi32> to vector<1x128xf32>
    %83 = arith.mulf %41, %82 : vector<1x128xf32>
    %cst_31 = arith.constant 0.000000e+00 : f32
    %84 = vector.broadcast %cst_31 : f32 to vector<1x128xf32>
    %85 = arith.cmpf oge, %36, %84 : vector<1x128xf32>
    %cst_32 = arith.constant 1.500000e+01 : f32
    %86 = vector.broadcast %cst_32 : f32 to vector<1x128xf32>
    %87 = arith.cmpf ole, %36, %86 : vector<1x128xf32>
    %88 = arith.andi %85, %87 : vector<1x128xi1>
    %cst_33 = arith.constant 0.000000e+00 : f32
    %cst_34 = arith.constant 1.500000e+01 : f32
    %89 = vector.broadcast %cst_33 : f32 to vector<1x128xf32>
    %90 = arith.maximumf %89, %36 : vector<1x128xf32>
    %91 = vector.broadcast %cst_34 : f32 to vector<1x128xf32>
    %92 = arith.minimumf %91, %90 : vector<1x128xf32>
    %93 = arith.fptosi %92 : vector<1x128xf32> to vector<1x128xi32>
    %94 = arith.extui %88 : vector<1x128xi1> to vector<1x128xi32>
    %95 = arith.sitofp %94 : vector<1x128xi32> to vector<1x128xf32>
    %96 = arith.mulf %39, %95 : vector<1x128xf32>
    %97 = tpu.iota {dimensions = array<i32: 0>} : vector<16x128xi32>
    %98 = vector.broadcast %54 : vector<1x128xi32> to vector<16x128xi32>
    %99 = arith.cmpi eq, %97, %98 : vector<16x128xi32>
    %100 = arith.extui %99 : vector<16x128xi1> to vector<16x128xi32>
    %101 = arith.sitofp %100 : vector<16x128xi32> to vector<16x128xf32>
    %102 = vector.broadcast %57 : vector<1x128xf32> to vector<16x128xf32>
    %103 = arith.mulf %101, %102 : vector<16x128xf32>
    %104 = vector.broadcast %67 : vector<1x128xi32> to vector<16x128xi32>
    %105 = arith.cmpi eq, %97, %104 : vector<16x128xi32>
    %106 = arith.extui %105 : vector<16x128xi1> to vector<16x128xi32>
    %107 = arith.sitofp %106 : vector<16x128xi32> to vector<16x128xf32>
    %108 = vector.broadcast %70 : vector<1x128xf32> to vector<16x128xf32>
    %109 = arith.mulf %107, %108 : vector<16x128xf32>
    %110 = arith.addf %103, %109 : vector<16x128xf32>
    %c0_35 = arith.constant 0 : index
    %c0_36 = arith.constant 0 : index
    %c0_37 = arith.constant 0 : index
    %111 = vector.load %arg3[%c0_35, %c0_36, %c0_37] : memref<1x64x16xf32, #tpu.memory_space<vmem>>, vector<1x64x16xf32>
    %112 = vector.shape_cast %111 : vector<1x64x16xf32> to vector<64x16xf32>
    %cst_38 = arith.constant dense<0.000000e+00> : vector<64x128xf32>
    %113 = tpu.matmul %112, %110, %cst_38 {dimension_numbers = #tpu.dot_dimension_numbers<[1], [0], [0], [1], [0, 0, 1, 1], [], []>} : vector<64x16xf32>, vector<16x128xf32>, vector<64x128xf32> -> vector<64x128xf32>
    %114 = tpu.iota {dimensions = array<i32: 0>} : vector<16x128xi32>
    %115 = vector.broadcast %80 : vector<1x128xi32> to vector<16x128xi32>
    %116 = arith.cmpi eq, %114, %115 : vector<16x128xi32>
    %117 = arith.extui %116 : vector<16x128xi1> to vector<16x128xi32>
    %118 = arith.sitofp %117 : vector<16x128xi32> to vector<16x128xf32>
    %119 = vector.broadcast %83 : vector<1x128xf32> to vector<16x128xf32>
    %120 = arith.mulf %118, %119 : vector<16x128xf32>
    %121 = vector.broadcast %93 : vector<1x128xi32> to vector<16x128xi32>
    %122 = arith.cmpi eq, %114, %121 : vector<16x128xi32>
    %123 = arith.extui %122 : vector<16x128xi1> to vector<16x128xi32>
    %124 = arith.sitofp %123 : vector<16x128xi32> to vector<16x128xf32>
    %125 = vector.broadcast %96 : vector<1x128xf32> to vector<16x128xf32>
    %126 = arith.mulf %124, %125 : vector<16x128xf32>
    %127 = arith.addf %120, %126 : vector<16x128xf32>
    %128 = tpu.concatenate %127, %127, %127, %127 in 0 : vector<16x128xf32>, vector<16x128xf32>, vector<16x128xf32>, vector<16x128xf32> -> vector<64x128xf32>
    %129 = arith.mulf %113, %128 : vector<64x128xf32>
    %130 = tpu.iota {dimensions = array<i32: 0>} : vector<4x64xi32>
    %131 = tpu.iota {dimensions = array<i32: 1>} : vector<4x64xi32>
    %c16_i32 = arith.constant 16 : i32
    %132 = vector.broadcast %c16_i32 : i32 to vector<4x64xi32>
    %133 = arith.muli %130, %132 : vector<4x64xi32>
    %134 = arith.cmpi sge, %131, %133 : vector<4x64xi32>
    %c16_i32_39 = arith.constant 16 : i32
    %135 = vector.broadcast %c16_i32_39 : i32 to vector<4x64xi32>
    %136 = arith.muli %130, %135 : vector<4x64xi32>
    %c16_i32_40 = arith.constant 16 : i32
    %137 = vector.broadcast %c16_i32_40 : i32 to vector<4x64xi32>
    %138 = arith.addi %136, %137 : vector<4x64xi32>
    %139 = arith.cmpi slt, %131, %138 : vector<4x64xi32>
    %140 = arith.andi %134, %139 : vector<4x64xi1>
    %141 = arith.extui %140 : vector<4x64xi1> to vector<4x64xi32>
    %142 = arith.sitofp %141 : vector<4x64xi32> to vector<4x64xf32>
    %cst_41 = arith.constant dense<0.000000e+00> : vector<4x128xf32>
    %143 = tpu.matmul %142, %129, %cst_41 {dimension_numbers = #tpu.dot_dimension_numbers<[1], [0], [0], [1], [0, 0, 1, 1], [], []>} : vector<4x64xf32>, vector<64x128xf32>, vector<4x128xf32> -> vector<4x128xf32>
    %c0_42 = arith.constant 0 : index
    %c0_43 = arith.constant 0 : index
    %c0_44 = arith.constant 0 : index
    %144 = vector.load %arg5[%c0_42, %c0_43, %c0_44] : memref<1x4x128xf32, #tpu.memory_space<vmem>>, vector<1x4x128xf32>
    %145 = vector.shape_cast %144 : vector<1x4x128xf32> to vector<4x128xf32>
    %146 = vector.shape_cast %143 : vector<4x128xf32> to vector<1x4x128xf32>
    tpu.vector_store %arg5[%c0_42, %c0_43, %c0_44], %146 {strides = array<i32>} : memref<1x4x128xf32, #tpu.memory_space<vmem>>, vector<1x4x128xf32>,
    return
  }
  func.func @transform_0(%arg0: i32, %arg1: i32) -> (i32, i32) {
    %c0_i32 = arith.constant 0 : i32
    %c0_i32_0 = arith.constant 0 : i32
    return %c0_i32, %arg1 : i32, i32
  }
  func.func @transform_1(%arg0: i32, %arg1: i32) -> (i32, i32, i32) {
    %c0_i32 = arith.constant 0 : i32
    %c0_i32_0 = arith.constant 0 : i32
    %c0_i32_1 = arith.constant 0 : i32
    return %arg0, %c0_i32, %c0_i32_0 : i32, i32, i32
  }
  func.func @transform_2(%arg0: i32, %arg1: i32) -> (i32, i32, i32) {
    %c0_i32 = arith.constant 0 : i32
    %c0_i32_0 = arith.constant 0 : i32
    return %arg0, %c0_i32, %arg1 : i32, i32, i32
  }
  func.func @transform_3(%arg0: i32, %arg1: i32) -> (i32, i32, i32) {
    %c0_i32 = arith.constant 0 : i32
    %c0_i32_0 = arith.constant 0 : i32
    return %arg0, %c0_i32, %arg1 : i32, i32, i32
  }
}

</mosaic_0001>

<llo_original>
// kernel: tpu_custom_call.1
$region0: #{tpu_custom_call.1}
  #allocation0 [shape = 'u32[]', space=smem, size = 0x4, offset = 0x4, fixed_abs, tag = 'smem constant byte address 0x4 - core index']
  #allocation1 [shape = 'u32[144,128]{1,0:T(1,128)}', space=vmem, size = 0x12000, scoped, tag = 'internal scratch']
  %s0 = inlined_call_operand.vmem [shape: f32[2,256], index: 0, kind: input, shape index: {}]
  %s1 = inlined_call_operand.vmem [shape: f32[2,64,16], index: 1, kind: input, shape index: {}]
  %s2 = inlined_call_operand.vmem [shape: f32[2,2,256], index: 2, kind: input, shape index: {}]
  %s3 = inlined_call_operand.hbm [shape: f32[2,4,256], index: 3, kind: output, shape index: {}]
  %s4 = sld [smem:[#allocation0]]
  $region45: #{tpu_custom_call.1} parent=0
    _
  %s6 = ssub.s32 1, %s4
  %s7 = scalar_select 0, %s6, %s4
  $region1: #{tpu_custom_call.1} parent=0
    #allocation2 [shape = 'u8[4096]{0}', space=vmem, size = 0x1000, scoped, tag = 'output window, operand 0']
    #allocation3 [shape = 's32[2]{0}', space=sflag, size = 0x8, scoped, tag = 'scoped memory for tpu_custom_call.1']
    %8 = vsyncpa [#allocation3], 0
    %s9 = scalar_lea.sflag [#allocation3], 1
    %10 = vsyncpa %s9, 0
    loop: start=0, step=1, limit=6
    $region2: #{tpu_custom_call.1} parent=1 // loop_pre_header
      _
    $region3: #{tpu_custom_call.1} parent=1 // loop_header
      %s12 = sphi 0, %s16
      %p13 = scmp.ge.s32.totalorder %s12, 6
      %s19 = sphi 0, %s31
      %s20 = sphi 0, %s27
      %s21 = sphi 0, %s19
      %s22 = sphi 0, %s20
      %s23 = sphi 0, %s21
      %s24 = sphi 0, %s22
      %s34 = sphi 0, %s36
      %s37 = sphi 0, %s34
      %s38 = sphi 0, %s37
      %s54 = sphi 0, %s38
      %s60 = sphi 0, %s62
      %s63 = sphi 0, %s60
      %s64 = sphi 0, %s63
      %s80 = sphi 0, %s64
      %s88 = sphi 0, %s90
      %s91 = sphi 0, %s88
      %s92 = sphi 0, %s91
      %s108 = sphi 0, %s92
      %s116 = sphi 0, %s118
      %s119 = sphi 0, %s116
      %s120 = sphi 0, %s119
      %s136 = sphi 0, %s120
    $region4: #{tpu_custom_call.1} parent=1 // loop_header_branch
      %15 = sbr.rel (%p13) target = $region8
    $region5: #{tpu_custom_call.1} parent=1 // loop_body
      %s17 = ssub.s32 %s12, 1
      %s18 = ssub.s32 %s12, 2
      %s25 = sadd.s32 1, %s20
      %p26 = scmp.ge.s32.totalorder %s25, 2
      %s27 = scalar_select %p26, 0, %s25
      %s28 = sadd.s32 1, %s19
      %s29 = scalar_select %p26, %s28, %s19
      %p30 = scmp.ge.s32.totalorder %s29, 2
      %s31 = scalar_select %p30, 0, %s29
      %s32 = ssub.s32 %s20, %s27
      %p33 = scmp.eq.s32.totalorder %s32, 0
      %s35 = sadd.s32 %s34, 1
      %s36 = scalar_select %p33, %s34, %s35
      %p39 = pneg %p33
      %p40 = scmp.eq.s32.totalorder %s12, 3
      %p41 = por %p39, %p40
      %p42 = scmp.ne.s32.totalorder %s34, %s37
      %p43 = scmp.eq.s32.totalorder %s12, 0
      %p44 = por %p42, %p43
      %p45 = scmp.ne.s32.totalorder %s34, %s37
      %p46 = scmp.eq.s32.totalorder %s17, 3
      %p47 = por %p45, %p46
      %p48 = scmp.ne.s32.totalorder %s37, %s38
      %p49 = scmp.eq.s32.totalorder %s17, 0
      %p50 = por %p48, %p49
      %p51 = scmp.ne.s32.totalorder %s37, %s38
      %p52 = scmp.eq.s32.totalorder %s18, 3
      %p53 = por %p51, %p52
      %p55 = scmp.ne.s32.totalorder %s38, %s54
      %p56 = scmp.eq.s32.totalorder %s18, 0
      %p57 = por %p55, %p56
      %s58 = ssub.s32 %s19, %s31
      %p59 = scmp.eq.s32.totalorder %s58, 0
      %s61 = sadd.s32 %s60, 1
      %s62 = scalar_select %p59, %s60, %s61
      %p65 = pneg %p59
      %p66 = scmp.eq.s32.totalorder %s12, 3
      %p67 = por %p65, %p66
      %p68 = scmp.ne.s32.totalorder %s60, %s63
      %p69 = scmp.eq.s32.totalorder %s12, 0
      %p70 = por %p68, %p69
      %p71 = scmp.ne.s32.totalorder %s60, %s63
      %p72 = scmp.eq.s32.totalorder %s17, 3
      %p73 = por %p71, %p72
      %p74 = scmp.ne.s32.totalorder %s63, %s64
      %p75 = scmp.eq.s32.totalorder %s17, 0
      %p76 = por %p74, %p75
      %p77 = scmp.ne.s32.totalorder %s63, %s64
      %p78 = scmp.eq.s32.totalorder %s18, 3
      %p79 = por %p77, %p78
      %p81 = scmp.ne.s32.totalorder %s64, %s80
      %p82 = scmp.eq.s32.totalorder %s18, 0
      %p83 = por %p81, %p82
      %s84 = ssub.s32 %s19, %s31
      %s85 = ssub.s32 %s20, %s27
      %s86 = sor.u32 %s84, %s85
      %p87 = scmp.eq.s32.totalorder %s86, 0
      %s89 = sadd.s32 %s88, 1
      %s90 = scalar_select %p87, %s88, %s89
      %p93 = pneg %p87
      %p94 = scmp.eq.s32.totalorder %s12, 3
      %p95 = por %p93, %p94
      %p96 = scmp.ne.s32.totalorder %s88, %s91
      %p97 = scmp.eq.s32.totalorder %s12, 0
      %p98 = por %p96, %p97
      %p99 = scmp.ne.s32.totalorder %s88, %s91
      %p100 = scmp.eq.s32.totalorder %s17, 3
      %p101 = por %p99, %p100
      %p102 = scmp.ne.s32.totalorder %s91, %s92
      %p103 = scmp.eq.s32.totalorder %s17, 0
      %p104 = por %p102, %p103
      %p105 = scmp.ne.s32.totalorder %s91, %s92
      %p106 = scmp.eq.s32.totalorder %s18, 3
      %p107 = por %p105, %p106
      %p109 = scmp.ne.s32.totalorder %s92, %s108
      %p110 = scmp.eq.s32.totalorder %s18, 0
      %p111 = por %p109, %p110
      %s112 = ssub.s32 %s19, %s31
      %s113 = ssub.s32 %s20, %s27
      %s114 = sor.u32 %s112, %s113
      %p115 = scmp.eq.s32.totalorder %s114, 0
      %s117 = sadd.s32 %s116, 1
      %s118 = scalar_select %p115, %s116, %s117
      %p121 = pneg %p115
      %p122 = scmp.eq.s32.totalorder %s12, 3
      %p123 = por %p121, %p122
      %p124 = scmp.ne.s32.totalorder %s116, %s119
      %p125 = scmp.eq.s32.totalorder %s12, 0
      %p126 = por %p124, %p125
      %p127 = scmp.ne.s32.totalorder %s116, %s119
      %p128 = scmp.eq.s32.totalorder %s17, 3
      %p129 = por %p127, %p128
      %p130 = scmp.ne.s32.totalorder %s119, %s120
      %p131 = scmp.eq.s32.totalorder %s17, 0
      %p132 = por %p130, %p131
      %p133 = scmp.ne.s32.totalorder %s119, %s120
      %p134 = scmp.eq.s32.totalorder %s18, 3
      %p135 = por %p133, %p134
      %p137 = scmp.ne.s32.totalorder %s120, %s136
      %p138 = scmp.eq.s32.totalorder %s18, 0
      %p139 = por %p137, %p138
      %p140 = scmp.le.s32.totalorder 1, %s12
      %p141 = scmp.lt.s32.totalorder %s12, 5
      %p142 = pnand %p140, %p141
      %p143 = pneg %p142
      // Predicated region
      $region9: #{tpu_custom_call.1} parent=5 // pred_check
        _
      $region10: #{tpu_custom_call.1} parent=5 // pred_check_branch
        %145 = sbr.rel (%p142) target = $region12
      $region11: #{tpu_custom_call.1} parent=5 // pred_region
        %s146 = ssub.s32 %s12, 1
      $region12: #{tpu_custom_call.1} parent=5 // pred_fallthru
        _
      %p147 = scmp.lt.s32.totalorder %s12, 4
      // Predicated region
      $region13: #{tpu_custom_call.1} parent=5 // pred_check
        %p148 = pneg %p147
      $region14: #{tpu_custom_call.1} parent=5 // pred_check_branch
        %150 = sbr.rel (%p148) target = $region16
      $region15: #{tpu_custom_call.1} parent=5 // pred_region
        // Predicated region
        $region17: #{tpu_custom_call.1} parent=15 // pred_check
          %p151 = pneg %p44
        $region18: #{tpu_custom_call.1} parent=15 // pred_check_branch
          %153 = sbr.rel (%p151) target = $region20
        $region19: #{tpu_custom_call.1} parent=15 // pred_region
          %p154 = scmp.lt.s32.totalorder %s20, 1
          %s155 = scalar_select %p154, %s20, 1
          %s156 = smul.addr %s155, 2
          %s157 = scalar_lea.vmem %s0, %s156
        $region20: #{tpu_custom_call.1} parent=15 // pred_fallthru
          _
        // Predicated region
        $region21: #{tpu_custom_call.1} parent=15 // pred_check
          %p158 = pneg %p70
        $region22: #{tpu_custom_call.1} parent=15 // pred_check_branch
          %160 = sbr.rel (%p158) target = $region24
        $region23: #{tpu_custom_call.1} parent=15 // pred_region
          %p161 = scmp.lt.s32.totalorder %s19, 1
          %s162 = scalar_select %p161, %s19, 1
          %s163 = smul.addr %s162, 8
          %s164 = smul.addr %s163, 8
          %s165 = scalar_lea.vmem %s1, %s164
        $region24: #{tpu_custom_call.1} parent=15 // pred_fallthru
          _
        // Predicated region
        $region25: #{tpu_custom_call.1} parent=15 // pred_check
          %p166 = pneg %p98
        $region26: #{tpu_custom_call.1} parent=15 // pred_check_branch
          %168 = sbr.rel (%p166) target = $region28
        $region27: #{tpu_custom_call.1} parent=15 // pred_region
          %p169 = scmp.lt.s32.totalorder %s19, 1
          %s170 = scalar_select %p169, %s19, 1
          %p171 = scmp.lt.s32.totalorder %s20, 1
          %s172 = scalar_select %p171, %s20, 1
          %s173 = smul.addr %s170, 2
          %s174 = sadd.s32 %s172, %s173
          %s175 = smul.addr %s174, 2
          %s176 = scalar_lea.vmem %s2, %s175
        $region28: #{tpu_custom_call.1} parent=15 // pred_fallthru
          _
      $region16: #{tpu_custom_call.1} parent=5 // pred_fallthru
        _
      %p177 = scmp.le.s32.totalorder 1, %s12
      %p178 = scmp.lt.s32.totalorder %s12, 5
      %p179 = pnand %p177, %p178
      %p180 = pneg %p179
      // Predicated region
      $region29: #{tpu_custom_call.1} parent=5 // pred_check
        _
      $region30: #{tpu_custom_call.1} parent=5 // pred_check_branch
        %182 = sbr.rel (%p179) target = $region32
      $region31: #{tpu_custom_call.1} parent=5 // pred_region
        %s183 = ssub.s32 %s12, 1
        %p184 = scmp.lt.s32.totalorder %s22, 1
        %s185 = scalar_select %p184, %s22, 1
        %s186 = smul.addr %s185, 2
        %s187 = scalar_lea.vmem %s0, %s186
        %p188 = pneg %p50
        %p189 = pneg %p47
        %p190 = scmp.lt.s32.totalorder %s21, 1
        %s191 = scalar_select %p190, %s21, 1
        %s192 = smul.addr %s191, 8
        %s193 = smul.addr %s192, 8
        %s194 = scalar_lea.vmem %s1, %s193
        %p195 = pneg %p76
        %p196 = pneg %p73
        %p197 = scmp.lt.s32.totalorder %s21, 1
        %s198 = scalar_select %p197, %s21, 1
        %p199 = scmp.lt.s32.totalorder %s22, 1
        %s200 = scalar_select %p199, %s22, 1
        %s201 = smul.addr %s198, 2
        %s202 = sadd.s32 %s200, %s201
        %s203 = smul.addr %s202, 2
        %s204 = scalar_lea.vmem %s2, %s203
        %p205 = pneg %p104
        %p206 = pneg %p101
        %p207 = pneg %p132
        %p208 = pneg %p129
        %s209 = sand.u32 %s119, 1
        %s210 = scalar_lea.sflag [#allocation3], %s209
        %s211 = sand.u32 %s119, 1
        %s212 = smul.addr %s211, 4
        %s213 = scalar_lea.vmem [#allocation2], %s212
        %p214 = scmp.lt.s32.totalorder %s22, 1
        %s215 = scalar_select %p214, %s22, 1
        %s216 = smul.addr %s215, 2
        %s217 = scalar_lea.vmem %s0, %s216
        %p218 = scmp.lt.s32.totalorder %s21, 1
        %s219 = scalar_select %p218, %s21, 1
        %s220 = smul.addr %s219, 8
        %s221 = smul.addr %s220, 8
        %s222 = scalar_lea.vmem %s1, %s221
        %p223 = scmp.lt.s32.totalorder %s21, 1
        %s224 = scalar_select %p223, %s21, 1
        %p225 = scmp.lt.s32.totalorder %s22, 1
        %s226 = scalar_select %p225, %s22, 1
        %s227 = smul.addr %s224, 2
        %s228 = sadd.s32 %s226, %s227
        %s229 = smul.addr %s228, 2
        %s230 = scalar_lea.vmem %s2, %s229
        %v231 = vld [vmem:[%s217] sm:$0x3]
        %v232 = vld [vmem:[%s230] sm:$0x3]
        %v233 = vadd.f32 %v231, %v232
        %v234 = vrcp.pop 15.0
        %v235 = vmul.f32 %v233, %v234
        %v236 = vsub.f32 %v235, 0.5
        %v237 = vmul.f32 %v236, 2.0
        %v238 = vadd.f32 %v237, 1.0
        %v239 = vmul.f32 %v238, 0.5
        %v240 = vmul.f32 %v239, 15.0
        %v241 = vfloor.f32 %v240
        %v242 = vadd.f32 %v241, 1.0
        %v243 = vsub.f32 %v240, %v241
        %v244 = vsub.f32 1.0, %v243
        %vm245 = vcmp.ge.f32.partialorder %v241, 0.0
        %vm246 = vcmp.le.f32.partialorder %v241, 15.0
        %vm247 = vmand %vm245, %vm246
        %v248 = vmax.f32 %v241, 0.0
        %v249 = vmin.f32 %v248, 15.0
        %v250 = vcvt.f32.s32.to.zero.pseudo %v249
        %v251 = vsel %vm247, 1, 0
        %v252 = vcvt.s32.f32 %v251
        %v253 = vmul.f32 %v244, %v252
        %vm254 = vcmp.ge.f32.partialorder %v242, 0.0
        %vm255 = vcmp.le.f32.partialorder %v242, 15.0
        %vm256 = vmand %vm254, %vm255
        %v257 = vmax.f32 %v242, 0.0
        %v258 = vmin.f32 %v257, 15.0
        %v259 = vcvt.f32.s32.to.zero.pseudo %v258
        %v260 = vsel %vm256, 1, 0
        %v261 = vcvt.s32.f32 %v260
        %v262 = vmul.f32 %v243, %v261
        %v263 = vlaneseq
        %v264 = vshrl.u32 %v263, 7
        %v265 = vadd.s32 %v264, 8
        %v266 = vlaneseq
        %v267 = vshrl.u32 %v266, 7
        %v268 = vsub.s32 1, %v267
        %v269 = vrot.slane %v250, %v268
        %vm270 = vcmp.eq.s32.totalorder %v264, %v269
        %vm271 = vcmp.eq.s32.totalorder %v265, %v269
        %v272 = vsel %vm270, 1, 0
        %v273 = vsel %vm271, 1, 0
        %v274 = vcvt.s32.f32 %v272
        %v275 = vcvt.s32.f32 %v273
        %v276 = vlaneseq
        %v277 = vshrl.u32 %v276, 7
        %v278 = vsub.s32 1, %v277
        %v279 = vrot.slane %v253, %v278
        %v280 = vmul.f32 %v274, %v279
        %v281 = vmul.f32 %v275, %v279
        %v282 = vlaneseq
        %v283 = vshrl.u32 %v282, 7
        %v284 = vsub.s32 1, %v283
        %v285 = vrot.slane %v259, %v284
        %vm286 = vcmp.eq.s32.totalorder %v264, %v285
        %vm287 = vcmp.eq.s32.totalorder %v265, %v285
        %v288 = vsel %vm286, 1, 0
        %v289 = vsel %vm287, 1, 0
        %v290 = vcvt.s32.f32 %v288
        %v291 = vcvt.s32.f32 %v289
        %v292 = vlaneseq
        %v293 = vshrl.u32 %v292, 7
        %v294 = vsub.s32 1, %v293
        %v295 = vrot.slane %v262, %v294
        %v296 = vmul.f32 %v290, %v295
        %v297 = vmul.f32 %v291, %v295
        %v298 = vadd.f32 %v280, %v296
        %v299 = vadd.f32 %v281, %v297
        %v300 = vld [vmem:[%s222] sm:$0xff]
        %v301 = vld [vmem:[%s222 + $0x8] sm:$0xff]
        %v302 = vld [vmem:[%s222 + $0x10] sm:$0xff]
        %v303 = vld [vmem:[%s222 + $0x18] sm:$0xff]
        %v304 = vld [vmem:[%s222 + $0x20] sm:$0xff]
        %v305 = vld [vmem:[%s222 + $0x28] sm:$0xff]
        %v306 = vld [vmem:[%s222 + $0x30] sm:$0xff]
        %v307 = vld [vmem:[%s222 + $0x38] sm:$0xff]
        %vm308 = vcmask 130048
        %v310 = vsel %vm308, %v300, 0
        %v313 = vsel %vm308, %v301, 0
        %v316 = vsel %vm308, %v302, 0
        %v319 = vsel %vm308, %v303, 0
        %v322 = vsel %vm308, %v304, 0
        %v325 = vsel %vm308, %v305, 0
        %v328 = vsel %vm308, %v306, 0
        %v331 = vsel %vm308, %v307, 0
        %333 = vmatprep.subr.mxu0 0.0
        %334 = vmatpush1.msra.mxu0 %v298
        %335 = vmatprep.subr.mxu0 0.0
        %336 = vmatpush1.msra.mxu0 %v299
        %337 = vmatprep.subr.mxu0 0.0
        %338 = vmatpush1.msra.mxu0 0.0
        %339 = vmatprep.subr.mxu0 0.0
        %340 = vmatpush1.msra.mxu0 0.0
        %341 = vmatprep.subr.mxu0 0.0
        %342 = vmatpush1.msra.mxu0 0.0
        %343 = vmatprep.subr.mxu0 0.0
        %344 = vmatpush1.msra.mxu0 0.0
        %345 = vmatprep.subr.mxu0 0.0
        %346 = vmatpush1.msra.mxu0 0.0
        %347 = vmatprep.subr.mxu0 0.0
        %348 = vmatpush1.msra.mxu0 0.0
        %349 = vmatprep.subr.mxu0 0.0
        %350 = vmatpush1.msra.mxu0 0.0
        %351 = vmatprep.subr.mxu0 0.0
        %352 = vmatpush1.msra.mxu0 0.0
        %353 = vmatprep.subr.mxu0 0.0
        %354 = vmatpush1.msra.mxu0 0.0
        %355 = vmatprep.subr.mxu0 0.0
        %356 = vmatpush1.msra.mxu0 0.0
        %357 = vmatprep.subr.mxu0 0.0
        %358 = vmatpush1.msra.mxu0 0.0
        %359 = vmatprep.subr.mxu0 0.0
        %360 = vmatpush1.msra.mxu0 0.0
        %361 = vmatprep.subr.mxu0 0.0
        %362 = vmatpush1.msra.mxu0 0.0
        %363 = vmatprep.subr.mxu0 0.0
        %364 = vmatpush1.msra.mxu0 0.0
        %365 = vmatprep.subr.mxu0 0.0
        %366 = vmatpush1.msra.mxu0 0.0
        %367 = vmatprep.subr.mxu0 0.0
        %368 = vmatpush1.msra.mxu0 0.0
        %369 = vmatprep.subr.mxu0 0.0
        %370 = vmatpush1.msra.mxu0 0.0
        %371 = vmatprep.subr.mxu0 0.0
        %372 = vmatpush1.msra.mxu0 0.0
        %373 = vmatprep.subr.mxu0 0.0
        %374 = vmatpush1.msra.mxu0 0.0
        %375 = vmatprep.subr.mxu0 0.0
        %376 = vmatpush1.msra.mxu0 0.0
        %377 = vmatprep.subr.mxu0 0.0
        %378 = vmatpush1.msra.mxu0 0.0
        %379 = vmatprep.subr.mxu0 0.0
        %380 = vmatpush1.msra.mxu0 0.0
        %381 = vmatprep.subr.mxu0 0.0
        %382 = vmatpush1.msra.mxu0 0.0
        %383 = vmatprep.subr.mxu0 0.0
        %384 = vmatpush1.msra.mxu0 0.0
        %385 = vmatprep.subr.mxu0 0.0
        %386 = vmatpush1.msra.mxu0 0.0
        %387 = vmatprep.subr.mxu0 0.0
        %388 = vmatpush1.msra.mxu0 0.0
        %389 = vmatprep.subr.mxu0 0.0
        %390 = vmatpush1.msra.mxu0 0.0
        %391 = vmatprep.subr.mxu0 0.0
        %392 = vmatpush1.msra.mxu0 0.0
        %393 = vmatprep.subr.mxu0 0.0
        %394 = vmatpush1.msra.mxu0 0.0
        %395 = vmatprep.subr.mxu0 0.0
        %396 = vmatpush1.msra.mxu0 0.0
        %397 = vmatprep.mubr.f32.mxu0 0.0
        %398 = vmatmul.mubr.f32.gmra.mrb[0].mxu0 %v310
        %v399 = vpop.f32.mrb[0].mxu0
        %v400 = vadd.f32 0.0, %v399
        %v401 = vpop.f32.mrb[0].mxu0
        %402 = vmatprep.mubr.f32.mxu0 0.0
        %403 = vmatmul.mubr.f32.gmra.mrb[0].mxu0 %v313
        %v404 = vpop.f32.mrb[0].mxu0
        %v405 = vadd.f32 0.0, %v404
        %v406 = vpop.f32.mrb[0].mxu0
        %407 = vmatprep.mubr.f32.mxu0 0.0
        %408 = vmatmul.mubr.f32.gmra.mrb[0].mxu0 %v316
        %v409 = vpop.f32.mrb[0].mxu0
        %v410 = vadd.f32 0.0, %v409
        %v411 = vpop.f32.mrb[0].mxu0
        %412 = vmatprep.mubr.f32.mxu0 0.0
        %413 = vmatmul.mubr.f32.gmra.mrb[0].mxu0 %v319
        %v414 = vpop.f32.mrb[0].mxu0
        %v415 = vadd.f32 0.0, %v414
        %v416 = vpop.f32.mrb[0].mxu0
        %417 = vmatprep.mubr.f32.mxu0 0.0
        %418 = vmatmul.mubr.f32.gmra.mrb[0].mxu0 %v322
        %v419 = vpop.f32.mrb[0].mxu0
        %v420 = vadd.f32 0.0, %v419
        %v421 = vpop.f32.mrb[0].mxu0
        %422 = vmatprep.mubr.f32.mxu0 0.0
        %423 = vmatmul.mubr.f32.gmra.mrb[0].mxu0 %v325
        %v424 = vpop.f32.mrb[0].mxu0
        %v425 = vadd.f32 0.0, %v424
        %v426 = vpop.f32.mrb[0].mxu0
        %427 = vmatprep.mubr.f32.mxu0 0.0
        %428 = vmatmul.mubr.f32.gmra.mrb[0].mxu0 %v328
        %v429 = vpop.f32.mrb[0].mxu0
        %v430 = vadd.f32 0.0, %v429
        %v431 = vpop.f32.mrb[0].mxu0
        %432 = vmatprep.mubr.f32.mxu0 0.0
        %433 = vmatmul.mubr.f32.gmra.mrb[0].mxu0 %v331
        %v434 = vpop.f32.mrb[0].mxu0
        %v435 = vadd.f32 0.0, %v434
        %v436 = vpop.f32.mrb[0].mxu0
        %437 = vdwg.mxu0
        %v438 = vlaneseq
        %v439 = vshrl.u32 %v438, 7
        %v440 = vsub.s32 0, %v439
        %v441 = vrot.slane %v250, %v440
        %vm442 = vcmp.eq.s32.totalorder %v264, %v441
        %vm443 = vcmp.eq.s32.totalorder %v265, %v441
        %v444 = vsel %vm442, 1, 0
        %v445 = vsel %vm443, 1, 0
        %v446 = vcvt.s32.f32 %v444
        %v447 = vcvt.s32.f32 %v445
        %v448 = vlaneseq
        %v449 = vshrl.u32 %v448, 7
        %v450 = vsub.s32 0, %v449
        %v451 = vrot.slane %v253, %v450
        %v452 = vmul.f32 %v446, %v451
        %v453 = vmul.f32 %v447, %v451
        %v454 = vlaneseq
        %v455 = vshrl.u32 %v454, 7
        %v456 = vsub.s32 0, %v455
        %v457 = vrot.slane %v259, %v456
        %vm458 = vcmp.eq.s32.totalorder %v264, %v457
        %vm459 = vcmp.eq.s32.totalorder %v265, %v457
        %v460 = vsel %vm458, 1, 0
        %v461 = vsel %vm459, 1, 0
        %v462 = vcvt.s32.f32 %v460
        %v463 = vcvt.s32.f32 %v461
        %v464 = vlaneseq
        %v465 = vshrl.u32 %v464, 7
        %v466 = vsub.s32 0, %v465
        %v467 = vrot.slane %v262, %v466
        %v468 = vmul.f32 %v462, %v467
        %v469 = vmul.f32 %v463, %v467
        %v470 = vadd.f32 %v452, %v468
        %v471 = vadd.f32 %v453, %v469
        %v472 = vmul.f32 %v400, %v470
        %v473 = vmul.f32 %v405, %v471
        %v474 = vmul.f32 %v410, %v470
        %v475 = vmul.f32 %v415, %v471
        %v476 = vmul.f32 %v420, %v470
        %v477 = vmul.f32 %v425, %v471
        %v478 = vmul.f32 %v430, %v470
        %v479 = vmul.f32 %v435, %v471
        %v480 = vlaneseq
        %v481 = vand.u32 %v480, 127
        %v482 = vmul.u32 %v264, 16
        %vm483 = vcmp.ge.s32.totalorder %v481, %v482
        %v484 = vadd.s32 %v482, 16
        %vm485 = vcmp.lt.s32.totalorder %v481, %v484
        %vm486 = vmand %vm483, %vm485
        %v487 = vsel %vm486, 1, 0
        %v488 = vcvt.s32.f32 %v487
        %vm489 = vcmask 523264
        %v491 = vsel %vm489, %v488, 0
        %493 = vmatprep.subr.mxu0 0.0
        %494 = vmatpush1.msra.mxu0 %v472
        %495 = vmatprep.subr.mxu0 0.0
        %496 = vmatpush1.msra.mxu0 %v473
        %497 = vmatprep.subr.mxu0 0.0
        %498 = vmatpush1.msra.mxu0 %v474
        %499 = vmatprep.subr.mxu0 0.0
        %500 = vmatpush1.msra.mxu0 %v475
        %501 = vmatprep.subr.mxu0 0.0
        %502 = vmatpush1.msra.mxu0 %v476
        %503 = vmatprep.subr.mxu0 0.0
        %504 = vmatpush1.msra.mxu0 %v477
        %505 = vmatprep.subr.mxu0 0.0
        %506 = vmatpush1.msra.mxu0 %v478
        %507 = vmatprep.subr.mxu0 0.0
        %508 = vmatpush1.msra.mxu0 %v479
        %509 = vmatprep.subr.mxu0 0.0
        %510 = vmatpush1.msra.mxu0 0.0
        %511 = vmatprep.subr.mxu0 0.0
        %512 = vmatpush1.msra.mxu0 0.0
        %513 = vmatprep.subr.mxu0 0.0
        %514 = vmatpush1.msra.mxu0 0.0
        %515 = vmatprep.subr.mxu0 0.0
        %516 = vmatpush1.msra.mxu0 0.0
        %517 = vmatprep.subr.mxu0 0.0
        %518 = vmatpush1.msra.mxu0 0.0
        %519 = vmatprep.subr.mxu0 0.0
        %520 = vmatpush1.msra.mxu0 0.0
        %521 = vmatprep.subr.mxu0 0.0
        %522 = vmatpush1.msra.mxu0 0.0
        %523 = vmatprep.subr.mxu0 0.0
        %524 = vmatpush1.msra.mxu0 0.0
        %525 = vmatprep.subr.mxu0 0.0
        %526 = vmatpush1.msra.mxu0 0.0
        %527 = vmatprep.subr.mxu0 0.0
        %528 = vmatpush1.msra.mxu0 0.0
        %529 = vmatprep.subr.mxu0 0.0
        %530 = vmatpush1.msra.mxu0 0.0
        %531 = vmatprep.subr.mxu0 0.0
        %532 = vmatpush1.msra.mxu0 0.0
        %533 = vmatprep.subr.mxu0 0.0
        %534 = vmatpush1.msra.mxu0 0.0
        %535 = vmatprep.subr.mxu0 0.0
        %536 = vmatpush1.msra.mxu0 0.0
        %537 = vmatprep.subr.mxu0 0.0
        %538 = vmatpush1.msra.mxu0 0.0
        %539 = vmatprep.subr.mxu0 0.0
        %540 = vmatpush1.msra.mxu0 0.0
        %541 = vmatprep.subr.mxu0 0.0
        %542 = vmatpush1.msra.mxu0 0.0
        %543 = vmatprep.subr.mxu0 0.0
        %544 = vmatpush1.msra.mxu0 0.0
        %545 = vmatprep.subr.mxu0 0.0
        %546 = vmatpush1.msra.mxu0 0.0
        %547 = vmatprep.subr.mxu0 0.0
        %548 = vmatpush1.msra.mxu0 0.0
        %549 = vmatprep.subr.mxu0 0.0
        %550 = vmatpush1.msra.mxu0 0.0
        %551 = vmatprep.subr.mxu0 0.0
        %552 = vmatpush1.msra.mxu0 0.0
        %553 = vmatprep.subr.mxu0 0.0
        %554 = vmatpush1.msra.mxu0 0.0
        %555 = vmatprep.subr.mxu0 0.0
        %556 = vmatpush1.msra.mxu0 0.0
        %557 = vmatprep.mubr.f32.mxu0 0.0
        %558 = vmatmul.mubr.f32.gmra.mrb[0].mxu0 %v491
        %v559 = vpop.f32.mrb[0].mxu0
        %v560 = vadd.f32 0.0, %v559
        %v561 = vpop.f32.mrb[0].mxu0
        %562 = vdwg.mxu0
        %563 = vst [vmem:[%s213] sm:$0xf] %v560
        %s564 = sand.u32 %s119, 1
        %s565 = scalar_lea.sflag [#allocation3], %s564
        %s566 = sand.u32 %s119, 1
        %s567 = smul.addr %s566, 4
        %s568 = scalar_lea.vmem [#allocation2], %s567
        // Predicated region
        $region33: #{tpu_custom_call.1} parent=31 // pred_check
          %p569 = pneg %p129
        $region34: #{tpu_custom_call.1} parent=31 // pred_check_branch
          %571 = sbr.rel (%p569) target = $region36
        $region35: #{tpu_custom_call.1} parent=31 // pred_region
          %s573 = ssub.s32 64, 64
          %574 = vsyncadd %s565, %s573
          %s575 = smul.addr %s21, 2
          %s576 = sadd.s32 %s22, %s575
          %s577 = smul.addr %s576, 64
          %s578 = scalar_lea.hbm %s3, %s577
          %s580 = sshll.u32 %s568, 4
          %s581 = int_to_ptr.vmem [resolvable:$true] %s580
          %583 = dma.vmem_to_hbm [thread:$0]  %s581, 64, %s578, %s565
        $region36: #{tpu_custom_call.1} parent=31 // pred_fallthru
          _
      $region32: #{tpu_custom_call.1} parent=5 // pred_fallthru
        _
      %p584 = scmp.le.s32.totalorder 2, %s12
      // Predicated region
      $region37: #{tpu_custom_call.1} parent=5 // pred_check
        %p585 = pneg %p584
      $region38: #{tpu_custom_call.1} parent=5 // pred_check_branch
        %587 = sbr.rel (%p585) target = $region40
      $region39: #{tpu_custom_call.1} parent=5 // pred_region
        %s588 = ssub.s32 %s12, 2
        // Predicated region
        $region41: #{tpu_custom_call.1} parent=39 // pred_check
          %p589 = pneg %p135
        $region42: #{tpu_custom_call.1} parent=39 // pred_check_branch
          %591 = sbr.rel (%p589) target = $region44
        $region43: #{tpu_custom_call.1} parent=39 // pred_region
          %s592 = sand.u32 %s120, 1
          %s593 = scalar_lea.sflag [#allocation3], %s592
          %s594 = sand.u32 %s120, 1
          %s595 = smul.addr %s594, 4
          %s596 = scalar_lea.vmem [#allocation2], %s595
          %597 = dma.done %s593, 64
        $region44: #{tpu_custom_call.1} parent=39 // pred_fallthru
          _
      $region40: #{tpu_custom_call.1} parent=5 // pred_fallthru
        _
    $region6: #{tpu_custom_call.1} parent=1 // loop_footer
      %s16 = sadd.s32 1, %s12
    $region7: #{tpu_custom_call.1} parent=1 // loop_footer_branch
      %11 = sbr.rel target = $region3
    $region8: #{tpu_custom_call.1} parent=1 // loop_exit
      _
    %598 = vsyncpa [#allocation3], 1
    %s599 = scalar_lea.sflag [#allocation3], 1
    %600 = vsyncpa %s599, 1

</llo_original>
